<compile_context>
chip_gen: v5e
topology: v5e:2x2
jax: 0.10.0
libtpu: 0.0.40
codegen_flags: <defaults>
</compile_context>

<pallas_src>
import functools
import math

import jax
import jax.numpy as jnp
from jax.experimental import pallas as pl
from jax.experimental.pallas import tpu as pltpu


# ---------------------------------------------------------------------------
# helpers
# ---------------------------------------------------------------------------
def _pick_tile(dim, target, align):
    """Largest divisor of `dim` that is <= target and a multiple of `align`.
    Falls back to the full dim (full-extent blocks are always legal)."""
    if dim <= target:
        return dim
    for t in range(target, 0, -1):
        if dim % t == 0 and t % align == 0:
            return t
    return dim


# ---------------------------------------------------------------------------
# Kernel 1: Conv1D  (y = x @ W + b), tiled + pipelined with accumulator
# ---------------------------------------------------------------------------
def _matmul_bias_kernel(x_ref, w_ref, b_ref, o_ref, acc_ref):
    k = pl.program_id(2)

    @pl.when(k == 0)
    def _init():
        acc_ref[...] = jnp.zeros(acc_ref.shape, acc_ref.dtype)

    acc_ref[...] += jnp.dot(x_ref[...], w_ref[...],
                            preferred_element_type=jnp.float32)

    @pl.when(k == pl.num_programs(2) - 1)
    def _store():
        o_ref[...] = (acc_ref[...] + b_ref[...].astype(jnp.float32)
                      ).astype(o_ref.dtype)


def conv1d(x2d, w, b, *, tm_target=256, tn_target=256, tk_target=512):
    """x2d: [M, K], w: [K, N], b: [N] -> [M, N]"""
    M, K = x2d.shape
    N = w.shape[1]
    tm = _pick_tile(M, tm_target, 8)
    tk = _pick_tile(K, tk_target, 128)
    tn = _pick_tile(N, tn_target, 128)
    b2d = b.reshape(1, N)
    return pl.pallas_call(
        _matmul_bias_kernel,
        out_shape=jax.ShapeDtypeStruct((M, N), x2d.dtype),
        grid=(M // tm, N // tn, K // tk),
        in_specs=[
            pl.BlockSpec((tm, tk), lambda i, j, k: (i, k)),
            pl.BlockSpec((tk, tn), lambda i, j, k: (k, j)),
            pl.BlockSpec((1, tn), lambda i, j, k: (0, j)),
        ],
        out_specs=pl.BlockSpec((tm, tn), lambda i, j, k: (i, j)),
        scratch_shapes=[pltpu.VMEM((tm, tn), jnp.float32)],
        compiler_params=pltpu.CompilerParams(
            dimension_semantics=("parallel", "parallel", "arbitrary"),
            vmem_limit_bytes=32 * 1024 * 1024,
        ),
    )(x2d, w, b2d)


# ---------------------------------------------------------------------------
# Kernel 2: flash-style causal attention, heads fused, lane-dense output
# ---------------------------------------------------------------------------
def _flash_attn_kernel(q_ref, k_ref, v_ref, o_ref, m_ref, l_ref, acc_ref, *,
                       n_head, head_dim, scale, masked_bias, tq, tkv):
    qi = pl.program_id(1)
    ki = pl.program_id(2)

    @pl.when(ki == 0)
    def _init():
        m_ref[...] = jnp.full(m_ref.shape, -jnp.inf, m_ref.dtype)
        l_ref[...] = jnp.zeros(l_ref.shape, l_ref.dtype)
        acc_ref[...] = jnp.zeros(acc_ref.shape, acc_ref.dtype)

    q_start = qi * tq
    k_start = ki * tkv

    # Skip KV tiles that lie entirely above the causal diagonal.
    @pl.when(k_start <= q_start + tq - 1)
    def _update():
        q = q_ref[...]            # [tq,  C]
        k = k_ref[...]            # [tkv, C]
        v = v_ref[...]            # [tkv, C]

        row = q_start + jax.lax.broadcasted_iota(jnp.int32, (tq, tkv), 0)
        col = k_start + jax.lax.broadcasted_iota(jnp.int32, (tq, tkv), 1)
        causal = col <= row

        new_m, new_l, alpha_full, pv_full = [], [], [], []
        for h in range(n_head):
            sl = slice(h * head_dim, (h + 1) * head_dim)
            qh = q[:, sl]
            kh = k[:, sl]
            vh = v[:, sl]

            # scores = (q @ k^T) / sqrt(D)   (no pre-transposed k needed)
            s = jax.lax.dot_general(
                qh, kh, (((1,), (1,)), ((), ())),
                preferred_element_type=jnp.float32) * scale           # [tq, tkv]
            s = jnp.where(causal, s, jnp.float32(masked_bias))

            m_prev = m_ref[:, h:h + 1]                                 # [tq, 1]
            m_new = jnp.maximum(m_prev, jnp.max(s, axis=-1, keepdims=True))
            alpha = jnp.exp(m_prev - m_new)                            # [tq, 1]
            p = jnp.exp(s - m_new)                                     # [tq, tkv]

            new_m.append(m_new)
            new_l.append(alpha * l_ref[:, h:h + 1]
                         + jnp.sum(p, axis=-1, keepdims=True))
            alpha_full.append(jnp.broadcast_to(alpha, (tq, head_dim)))
            pv_full.append(jnp.dot(p.astype(vh.dtype), vh,
                                   preferred_element_type=jnp.float32))

        # Full-width scratch updates (lane-dense stores).
        m_ref[...] = jnp.concatenate(new_m, axis=-1)
        l_ref[...] = jnp.concatenate(new_l, axis=-1)
        acc_ref[...] = (jnp.concatenate(alpha_full, axis=-1) * acc_ref[...]
                        + jnp.concatenate(pv_full, axis=-1))

    @pl.when(ki == pl.num_programs(2) - 1)
    def _finalize():
        inv = pl.reciprocal(l_ref[...], approx=True)                   # [tq, H]
        acc = acc_ref[...]                                             # [tq, C]
        out = [acc[:, h * head_dim:(h + 1) * head_dim] * inv[:, h:h + 1]
               for h in range(n_head)]
        # Single head-merged, lane-dense [tq, C] store.
        o_ref[...] = jnp.concatenate(out, axis=-1).astype(o_ref.dtype)


def attention_core(q, k, v, n_head, *, tq_target=256, tkv_target=256):
    """q, k, v: [B, T, C] (heads NOT yet split) -> [B, T, C] (heads merged)."""
    B, T, C = q.shape
    D = C // n_head
    tq = _pick_tile(T, tq_target, 8)
    tkv = _pick_tile(T, tkv_target, 8)

    kernel = functools.partial(
        _flash_attn_kernel,
        n_head=n_head, head_dim=D, scale=1.0 / math.sqrt(float(D)),
        masked_bias=-10000.0, tq=tq, tkv=tkv)

    q_spec = pl.BlockSpec((None, tq, C), lambda b, qi, ki: (b, qi, 0))
    kv_spec = pl.BlockSpec((None, tkv, C), lambda b, qi, ki: (b, ki, 0))

    return pl.pallas_call(
        kernel,
        out_shape=jax.ShapeDtypeStruct((B, T, C), q.dtype),
        grid=(B, T // tq, T // tkv),
        in_specs=[q_spec, kv_spec, kv_spec],
        out_specs=pl.BlockSpec((None, tq, C), lambda b, qi, ki: (b, qi, 0)),
        scratch_shapes=[
            pltpu.VMEM((tq, n_head), jnp.float32),   # running max m
            pltpu.VMEM((tq, n_head), jnp.float32),   # running denom l
            pltpu.VMEM((tq, C), jnp.float32),        # running output acc
        ],
        compiler_params=pltpu.CompilerParams(
            dimension_semantics=("parallel", "parallel", "arbitrary"),
            vmem_limit_bytes=32 * 1024 * 1024,
        ),
    )(q, k, v)


# ---------------------------------------------------------------------------
# Full Attention module forward
# ---------------------------------------------------------------------------
def init_params(key, nx):
    k1, k2 = jax.random.split(key)
    return {
        "w_attn": (0.02 * jax.random.normal(k1, (nx, 3 * nx))).astype(jnp.float32),
        "b_attn": jnp.zeros((3 * nx,), jnp.float32),
        "w_proj": (0.02 * jax.random.normal(k2, (nx, nx))).astype(jnp.float32),
        "b_proj": jnp.zeros((nx,), jnp.float32),
    }


def attention_forward(hidden_states, params, n_head):
    B, T, C = hidden_states.shape

    # c_attn (tiled Conv1D)
    qkv = conv1d(hidden_states.reshape(B * T, C),
                 params["w_attn"], params["b_attn"]).reshape(B, T, 3 * C)
    # Contiguous channel split only; head split/merge happens inside the kernel.
    q, k, v = jnp.split(qkv, 3, axis=-1)

    # flash attention core (causal, heads fused, lane-dense [B,T,C] output)
    a = attention_core(q, k, v, n_head)

    # c_proj (tiled Conv1D)
    out = conv1d(a.reshape(B * T, C), params["w_proj"], params["b_proj"])
    return out.reshape(B, T, C)


# ---------------------------------------------------------------------------
# Pure-JAX reference for sanity checking
# ---------------------------------------------------------------------------
def attention_reference(x, params, n_head):
    B, T, C = x.shape
    D = C // n_head
    qkv = x.reshape(B * T, C) @ params["w_attn"] + params["b_attn"]
    qkv = qkv.reshape(B, T, 3 * C)
    q, k, v = jnp.split(qkv, 3, axis=2)
    q = q.reshape(B, T, n_head, D).transpose(0, 2, 1, 3)
    k = k.reshape(B, T, n_head, D).transpose(0, 2, 3, 1)
    v = v.reshape(B, T, n_head, D).transpose(0, 2, 1, 3)
    w = jnp.einsum("bhtd,bhds->bhts", q, k) / math.sqrt(float(D))
    mask = jnp.tril(jnp.ones((T, T), bool))[None, None]
    w = jnp.where(mask, w, jnp.float32(-10000.0))
    p = jax.nn.softmax(w, axis=-1)
    a = jnp.einsum("bhts,bhsd->bhtd", p, v)
    a = a.transpose(0, 2, 1, 3).reshape(B, T, C)
    return (a.reshape(B * T, C) @ params["w_proj"] + params["b_proj"]).reshape(B, T, C)


if __name__ == "__main__":
    B, T, C, n_head = 2, 8, 32, 4   # n_ctx = T = 8, nx = 32, head_dim = 8

    key = jax.random.PRNGKey(0)
    pkey, xkey = jax.random.split(key)
    params = init_params(pkey, C)
    x = jax.random.normal(xkey, (B, T, C), jnp.float32)

    out = jax.block_until_ready(attention_forward(x, params, n_head))
    ref = attention_reference(x, params, n_head)

    assert out.shape == (B, T, C)
    # tolerance loosened slightly for approx reciprocal in the softmax denom
    assert jnp.allclose(out, ref, atol=2e-4, rtol=2e-3), "mismatch vs reference"

    print("KERNEL_OK")
</pallas_src>

<mosaic_0001>
module attributes {stable_mosaic.version = 11 : i64} {
  func.func @_matmul_bias_kernel(%arg0: i32, %arg1: i32, %arg2: i32, %arg3: memref<16x32xf32, #tpu.memory_space<vmem>>, %arg4: memref<32x96xf32, #tpu.memory_space<vmem>>, %arg5: memref<1x96xf32, #tpu.memory_space<vmem>>, %arg6: memref<16x96xf32, #tpu.memory_space<vmem>>, %arg7: memref<16x96xf32, #tpu.memory_space<vmem>>) attributes {dimension_semantics = [#tpu.dimension_semantics<parallel>, #tpu.dimension_semantics<parallel>, #tpu.dimension_semantics<arbitrary>], iteration_bounds = array<i64: 1, 1, 1>, scalar_prefetch = 0 : i64, scratch_operands = 1 : i64, tpu.core_type = #tpu.core_type<tc>, window_params = [{transform_indices = @transform_0, window_bounds = array<i64: 16, 32>}, {transform_indices = @transform_1, window_bounds = array<i64: 32, 96>}, {transform_indices = @transform_2, window_bounds = array<i64: 1, 96>}, {transform_indices = @transform_3, window_bounds = array<i64: 16, 96>}]} {
    %c0_i32 = arith.constant 0 : i32
    %0 = arith.cmpi eq, %arg2, %c0_i32 : i32
    %1 = arith.extui %0 : i1 to i32
    %c0_i32_0 = arith.constant 0 : i32
    %2 = arith.cmpi ne, %1, %c0_i32_0 : i32
    scf.if %2 {
      %cst_10 = arith.constant 0.000000e+00 : f32
      %12 = vector.broadcast %cst_10 : f32 to vector<16x96xf32>
      %c0_11 = arith.constant 0 : index
      %c0_12 = arith.constant 0 : index
      %13 = vector.load %arg7[%c0_11, %c0_12] : memref<16x96xf32, #tpu.memory_space<vmem>>, vector<16x96xf32>
      tpu.vector_store %arg7[%c0_11, %c0_12], %12 {strides = array<i32>} : memref<16x96xf32, #tpu.memory_space<vmem>>, vector<16x96xf32>,
    } else {
    }
    %c0 = arith.constant 0 : index
    %c0_1 = arith.constant 0 : index
    %3 = vector.load %arg7[%c0, %c0_1] : memref<16x96xf32, #tpu.memory_space<vmem>>, vector<16x96xf32>
    %c0_2 = arith.constant 0 : index
    %c0_3 = arith.constant 0 : index
    %4 = vector.load %arg3[%c0_2, %c0_3] : memref<16x32xf32, #tpu.memory_space<vmem>>, vector<16x32xf32>
    %c0_4 = arith.constant 0 : index
    %c0_5 = arith.constant 0 : index
    %5 = vector.load %arg4[%c0_4, %c0_5] : memref<32x96xf32, #tpu.memory_space<vmem>>, vector<32x96xf32>
    %cst = arith.constant dense<0.000000e+00> : vector<16x96xf32>
    %6 = tpu.matmul %4, %5, %cst {dimension_numbers = #tpu.dot_dimension_numbers<[1], [0], [0], [1], [0, 0, 1, 1], [], []>} : vector<16x32xf32>, vector<32x96xf32>, vector<16x96xf32> -> vector<16x96xf32>
    %7 = arith.addf %3, %6 : vector<16x96xf32>
    %c0_6 = arith.constant 0 : index
    %c0_7 = arith.constant 0 : index
    %8 = vector.load %arg7[%c0_6, %c0_7] : memref<16x96xf32, #tpu.memory_space<vmem>>, vector<16x96xf32>
    tpu.vector_store %arg7[%c0_6, %c0_7], %7 {strides = array<i32>} : memref<16x96xf32, #tpu.memory_space<vmem>>, vector<16x96xf32>,
    %c0_i32_8 = arith.constant 0 : i32
    %9 = arith.cmpi eq, %arg2, %c0_i32_8 : i32
    %10 = arith.extui %9 : i1 to i32
    %c0_i32_9 = arith.constant 0 : i32
    %11 = arith.cmpi ne, %10, %c0_i32_9 : i32
    scf.if %11 {
      %c0_10 = arith.constant 0 : index
      %c0_11 = arith.constant 0 : index
      %12 = vector.load %arg7[%c0_10, %c0_11] : memref<16x96xf32, #tpu.memory_space<vmem>>, vector<16x96xf32>
      %c0_12 = arith.constant 0 : index
      %c0_13 = arith.constant 0 : index
      %13 = vector.load %arg5[%c0_12, %c0_13] : memref<1x96xf32, #tpu.memory_space<vmem>>, vector<1x96xf32>
      %14 = vector.broadcast %13 : vector<1x96xf32> to vector<16x96xf32>
      %15 = arith.addf %12, %14 : vector<16x96xf32>
      %c0_14 = arith.constant 0 : index
      %c0_15 = arith.constant 0 : index
      %16 = vector.load %arg6[%c0_14, %c0_15] : memref<16x96xf32, #tpu.memory_space<vmem>>, vector<16x96xf32>
      tpu.vector_store %arg6[%c0_14, %c0_15], %15 {strides = array<i32>} : memref<16x96xf32, #tpu.memory_space<vmem>>, vector<16x96xf32>,
    } else {
    }
    return
  }
  func.func @transform_0(%arg0: i32, %arg1: i32, %arg2: i32) -> (i32, i32) {
    %c0_i32 = arith.constant 0 : i32
    return %arg0, %arg2 : i32, i32
  }
  func.func @transform_1(%arg0: i32, %arg1: i32, %arg2: i32) -> (i32, i32) {
    %c0_i32 = arith.constant 0 : i32
    return %arg2, %arg1 : i32, i32
  }
  func.func @transform_2(%arg0: i32, %arg1: i32, %arg2: i32) -> (i32, i32) {
    %c0_i32 = arith.constant 0 : i32
    %c0_i32_0 = arith.constant 0 : i32
    return %c0_i32, %arg1 : i32, i32
  }
  func.func @transform_3(%arg0: i32, %arg1: i32, %arg2: i32) -> (i32, i32) {
    %c0_i32 = arith.constant 0 : i32
    return %arg0, %arg1 : i32, i32
  }
}

</mosaic_0001>

<llo_original>
// kernel: tpu_custom_call.1
$region0: #{tpu_custom_call.1}
  #allocation0 [shape = 'u32[]', space=smem, size = 0x4, offset = 0x4, fixed_abs, tag = 'smem constant byte address 0x4 - core index']
  #allocation1 [shape = 'u32[72,128]{1,0:T(1,128)}', space=vmem, size = 0x9000, scoped, tag = 'internal scratch']
  #allocation2 [shape = 'f32[16,96]{1,0:T(8,128)}', space=vmem, size = 0x2000, scoped, tag = 'scratch operand']
  %s0 = inlined_call_operand.hbm [shape: f32[16,32], index: 0, kind: input, shape index: {}]
  %s1 = inlined_call_operand.hbm [shape: f32[32,96], index: 1, kind: input, shape index: {}]
  %s2 = inlined_call_operand.vmem [shape: f32[1,96], index: 2, kind: input, shape index: {}]
  %s3 = inlined_call_operand.hbm [shape: f32[16,96], index: 3, kind: output, shape index: {}]
  %s4 = sld [smem:[#allocation0]]
  $region38: #{tpu_custom_call.1} parent=0
    _
  %s6 = ssub.s32 1, %s4
  %s7 = scalar_select 0, %s6, %s4
  $region1: #{tpu_custom_call.1} parent=0
    #allocation3 [shape = 'u8[8192]{0}', space=vmem, size = 0x2000, scoped, tag = 'input window, operand 0, single buffered']
    #allocation4 [shape = 's32[1]{0}', space=sflag, size = 0x4, scoped, tag = 'scoped memory for tpu_custom_call.1']
    #allocation5 [shape = 's32[1]{0}', space=sflag, size = 0x4, scoped, tag = 'scoped memory for tpu_custom_call.1']
    #allocation6 [shape = 'u8[16384]{0}', space=vmem, size = 0x4000, scoped, tag = 'input window, operand 1, single buffered']
    #allocation7 [shape = 's32[1]{0}', space=sflag, size = 0x4, scoped, tag = 'scoped memory for tpu_custom_call.1']
    #allocation8 [shape = 'u8[8192]{0}', space=vmem, size = 0x2000, scoped, tag = 'output window, operand 0, single buffered']
    %8 = vsyncpa [#allocation4], 0
    %9 = vsyncpa [#allocation7], 0
    %10 = vsyncpa [#allocation5], 0
    // Predicated region
    $region2: #{tpu_custom_call.1} parent=1 // pred_check
      _
    $region3: #{tpu_custom_call.1} parent=1 // pred_check_branch
      %12 = sbr.rel (0) target = $region5
    $region4: #{tpu_custom_call.1} parent=1 // pred_region
      %14 = vsyncadd [#allocation4], 0
      %s15 = sshll.u32 %s0, 4
      %s16 = int_to_ptr.hbm [resolvable:$true] %s15
      %s17 = sshll.u32 [#allocation3], 4
      %s18 = int_to_ptr.vmem [resolvable:$true] %s17
      %23 = dma.hbm_to_vmem [thread:$0]  %s16, 256, %s18, [#allocation4], 128, 128, 8
    $region5: #{tpu_custom_call.1} parent=1 // pred_fallthru
      _
    // Predicated region
    $region6: #{tpu_custom_call.1} parent=1 // pred_check
      _
    $region7: #{tpu_custom_call.1} parent=1 // pred_check_branch
      %25 = sbr.rel (0) target = $region9
    $region8: #{tpu_custom_call.1} parent=1 // pred_region
      %27 = vsyncadd [#allocation7], 0
      %s28 = sshll.u32 %s1, 4
      %s29 = int_to_ptr.hbm [resolvable:$true] %s28
      %s30 = sshll.u32 [#allocation6], 4
      %s31 = int_to_ptr.vmem [resolvable:$true] %s30
      %36 = dma.hbm_to_vmem [thread:$0]  %s29, 512, %s31, [#allocation7], 128, 128, 8
    $region9: #{tpu_custom_call.1} parent=1 // pred_fallthru
      _
    // Predicated region
    $region10: #{tpu_custom_call.1} parent=1 // pred_check
      _
    $region11: #{tpu_custom_call.1} parent=1 // pred_check_branch
      %38 = sbr.rel (0) target = $region13
    $region12: #{tpu_custom_call.1} parent=1 // pred_region
      _
    $region13: #{tpu_custom_call.1} parent=1 // pred_fallthru
      _
    // Predicated region
    $region14: #{tpu_custom_call.1} parent=1 // pred_check
      _
    $region15: #{tpu_custom_call.1} parent=1 // pred_check_branch
      %40 = sbr.rel (0) target = $region17
    $region16: #{tpu_custom_call.1} parent=1 // pred_region
      %42 = dma.done [#allocation4], 256
    $region17: #{tpu_custom_call.1} parent=1 // pred_fallthru
      _
    // Predicated region
    $region18: #{tpu_custom_call.1} parent=1 // pred_check
      _
    $region19: #{tpu_custom_call.1} parent=1 // pred_check_branch
      %44 = sbr.rel (0) target = $region21
    $region20: #{tpu_custom_call.1} parent=1 // pred_region
      %46 = dma.done [#allocation7], 512
    $region21: #{tpu_custom_call.1} parent=1 // pred_fallthru
      _
    %p47 = scmp.eq.s32.totalorder 0, 0
    // Predicated region
    $region22: #{tpu_custom_call.1} parent=1 // pred_check
      %p48 = pneg %p47
    $region23: #{tpu_custom_call.1} parent=1 // pred_check_branch
      %50 = sbr.rel (%p48) target = $region25
    $region24: #{tpu_custom_call.1} parent=1 // pred_region
      %vm51 = vcmask 785408
      %52 = vst.msk [vmem:[#allocation2] sm:$0xff] %vm51, 0.0
      %53 = vst.msk [vmem:[#allocation2 + $0x8] sm:$0xff] %vm51, 0.0
    $region25: #{tpu_custom_call.1} parent=1 // pred_fallthru
      _
    %v54 = vld [vmem:[#allocation2] sm:$0xff]
    %v55 = vld [vmem:[#allocation2 + $0x8] sm:$0xff]
    %v56 = vld [vmem:[#allocation3] sm:$0xff]
    %v57 = vld [vmem:[#allocation3 + $0x8] sm:$0xff]
    %v58 = vld [vmem:[#allocation6] sm:$0xff]
    %v59 = vld [vmem:[#allocation6 + $0x8] sm:$0xff]
    %v60 = vld [vmem:[#allocation6 + $0x10] sm:$0xff]
    %v61 = vld [vmem:[#allocation6 + $0x18] sm:$0xff]
    %vm62 = vcmask 261120
    %v64 = vsel %vm62, %v56, 0
    %v67 = vsel %vm62, %v57, 0
    %69 = vmatpush.msra.mxu0 0.0
    %70 = vmatpush.msra.mxu0 0.0
    %71 = vmatpush.msra.mxu0 0.0
    %72 = vmatpush.msra.mxu0 0.0
    %73 = vmatpush.msra.mxu0 0.0
    %74 = vmatpush.msra.mxu0 0.0
    %75 = vmatpush.msra.mxu0 0.0
    %76 = vmatpush.msra.mxu0 0.0
    %77 = vmatpush.msra.mxu0 0.0
    %78 = vmatpush.msra.mxu0 0.0
    %79 = vmatpush.msra.mxu0 0.0
    %80 = vmatpush.msra.mxu0 0.0
    %81 = vmatpush.msra.mxu0 %v61
    %82 = vmatpush.msra.mxu0 %v60
    %83 = vmatpush.msra.mxu0 %v59
    %84 = vmatpush.msra.mxu0 %v58
    %85 = vmatmul.f32.gmra.mxu0 %v64
    %v86 = vpop.f32.mrf.mxu0
    %v87 = vadd.f32 0.0, %v86
    %88 = vmatmul.f32.gmra.mxu0 %v67
    %v89 = vpop.f32.mrf.mxu0
    %v90 = vadd.f32 0.0, %v89
    %91 = vdwg.mxu0
    %v92 = vadd.f32 %v54, %v87
    %v93 = vadd.f32 %v55, %v90
    %vm94 = vcmask 785408
    %95 = vst.msk [vmem:[#allocation2] sm:$0xff] %vm94, %v92
    %96 = vst.msk [vmem:[#allocation2 + $0x8] sm:$0xff] %vm94, %v93
    // Predicated region
    $region26: #{tpu_custom_call.1} parent=1 // pred_check
      %p97 = pneg %p47
    $region27: #{tpu_custom_call.1} parent=1 // pred_check_branch
      %99 = sbr.rel (%p97) target = $region29
    $region28: #{tpu_custom_call.1} parent=1 // pred_region
      %v100 = vld [vmem:[#allocation2] sm:$0xff]
      %v101 = vld [vmem:[#allocation2 + $0x8] sm:$0xff]
      %v102 = vld [vmem:[%s2] sm:$0x1]
      %v104 = vperm.slane %v102, 0
      %v106 = vadd.f32 %v100, %v104
      %v107 = vadd.f32 %v101, %v104
      %108 = vst.msk [vmem:[#allocation8] sm:$0xff] %vm94, %v106
      %109 = vst.msk [vmem:[#allocation8 + $0x8] sm:$0xff] %vm94, %v107
    $region29: #{tpu_custom_call.1} parent=1 // pred_fallthru
      _
    // Predicated region
    $region30: #{tpu_custom_call.1} parent=1 // pred_check
      _
    $region31: #{tpu_custom_call.1} parent=1 // pred_check_branch
      %111 = sbr.rel (0) target = $region33
    $region32: #{tpu_custom_call.1} parent=1 // pred_region
      %113 = vsyncadd [#allocation5], 0
      %s114 = sshll.u32 [#allocation8], 4
      %s115 = int_to_ptr.vmem [resolvable:$true] %s114
      %s116 = sshll.u32 %s3, 4
      %s117 = int_to_ptr.hbm [resolvable:$true] %s116
      %122 = dma.vmem_to_hbm [thread:$0]  %s115, 256, %s117, [#allocation5], 128, 128, 8
    $region33: #{tpu_custom_call.1} parent=1 // pred_fallthru
      _
    // Predicated region
    $region34: #{tpu_custom_call.1} parent=1 // pred_check
      _
    $region35: #{tpu_custom_call.1} parent=1 // pred_check_branch
      %124 = sbr.rel (0) target = $region37
    $region36: #{tpu_custom_call.1} parent=1 // pred_region
      %126 = dma.done [#allocation5], 256
    $region37: #{tpu_custom_call.1} parent=1 // pred_fallthru
      _
    %127 = vsyncpa [#allocation4], 1
    %128 = vsyncpa [#allocation7], 1
    %129 = vsyncpa [#allocation5], 1

</llo_original>
